<compile_context>
chip_gen: v7x
topology: tpu7x:2x2x1
jax: 0.10.0
libtpu: 0.0.40
codegen_flags: <defaults>
</compile_context>

<pallas_src>
import functools

import jax
import jax.numpy as jnp
from jax.experimental import pallas as pl
from jax.experimental.pallas import tpu as pltpu


def _layernorm_kernel(x_ref, w_ref, b_ref, o_ref):
    # x_ref / o_ref: (1, CF, tile_t); w_ref / b_ref: (CF, 1)
    x = x_ref[0].astype(jnp.float32)                        # (CF, tile_t)
    cf = x.shape[0]

    mean = jnp.sum(x, axis=0, keepdims=True) * (1.0 / cf)   # (1, tile_t)
    diff = x - mean
    # torch.std default is unbiased (divisor N-1).  Requires C*F > 1, same
    # constraint as the PyTorch module itself.
    var = jnp.sum(diff * diff, axis=0, keepdims=True) * (1.0 / (cf - 1))
    std = jnp.sqrt(var)
    # One reciprocal per column, then cheap VPU multiplies.  Exact (not
    # approx) so the output matches the torch reference at tight tolerance;
    # this kernel is memory-bound so the (1, tile) divide is free anyway.
    inv = pl.reciprocal(std + 1e-8, approx=False)

    w = w_ref[...].astype(jnp.float32)                      # (CF, 1)
    b = b_ref[...].astype(jnp.float32)
    o_ref[0] = (diff * inv * w + b).astype(o_ref.dtype)


def _vmem_plan():
    """Per-generation (block-buffer budget, vmem_limit_bytes)."""
    block_budget = 12 * 1024 * 1024     # safe under v5e's 16 MiB scoped default
    vmem_limit = None
    try:
        phys = int(pltpu.get_tpu_info().vmem_capacity_bytes)
        if phys >= 96 * 1024 * 1024:    # v5e / v6e: 128 MiB physical VMEM
            block_budget = 24 * 1024 * 1024
            vmem_limit = 64 * 1024 * 1024
        else:                           # v7x-class: 64 MiB physical VMEM
            block_budget = 16 * 1024 * 1024
            vmem_limit = 44 * 1024 * 1024
    except Exception:
        pass                            # conservative defaults work everywhere
    return block_budget, vmem_limit


def _pick_lane_tile(cf, t, itemsize, budget):
    """Lane tile along T: largest multiple of 128 whose double-buffered
    in+out working set (~4 * CF * tile * itemsize) fits the budget, or the
    full (legal) extent when T is small / ragged-but-small."""
    max_lanes = max(128, budget // (4 * cf * itemsize))
    tile = max(128, (min(max_lanes, t) // 128) * 128)
    if t % 128 != 0 and t <= tile:
        # Small ragged T: full extent is a legal block and avoids masked
        # stores on every step.  Large ragged T falls through to a
        # 128-aligned tile; Pallas masks only the final partial block.
        return int(t)
    return int(tile)


@functools.partial(jax.jit, static_argnames=("lane_tile",))
def layer_norm(x, w, b, lane_tile=None):
    """x: (B, C, F, T); w, b: (1, C, F, 1). Returns (B, C, F, T)."""
    B, C, F, T = x.shape
    CF = C * F
    itemsize = jnp.dtype(x.dtype).itemsize

    # Free layout plumbing only: contiguous reshape, no transpose, no extra
    # HBM round trips.
    x3 = x.reshape(B, CF, T)
    w2 = w.reshape(CF, 1)
    b2 = b.reshape(CF, 1)

    budget, vmem_limit = _vmem_plan()
    tile = lane_tile if lane_tile is not None else _pick_lane_tile(
        CF, T, itemsize, budget)
    # Keep at least two grid steps so v7x's two TensorCores both get work
    # (no cost on single-TC v5e/v6e).
    if B * pl.cdiv(T, tile) < 2 and T >= 256:
        tile = max(128, ((T // 2) // 128) * 128)

    grid = (B, pl.cdiv(T, tile))

    cost = pl.CostEstimate(
        flops=7 * B * CF * T,
        transcendentals=2 * B * T,
        bytes_accessed=(2 * B * CF * T + 2 * CF) * itemsize,
    )

    out3 = pl.pallas_call(
        _layernorm_kernel,
        out_shape=jax.ShapeDtypeStruct((B, CF, T), x.dtype),
        grid_spec=pltpu.PrefetchScalarGridSpec(
            num_scalar_prefetch=0,
            grid=grid,
            in_specs=[
                pl.BlockSpec((1, CF, tile), lambda bi, ti: (bi, 0, ti)),
                pl.BlockSpec((CF, 1), lambda bi, ti: (0, 0)),
                pl.BlockSpec((CF, 1), lambda bi, ti: (0, 0)),
            ],
            out_specs=pl.BlockSpec((1, CF, tile), lambda bi, ti: (bi, 0, ti)),
        ),
        compiler_params=pltpu.CompilerParams(
            dimension_semantics=("parallel", "parallel"),
            vmem_limit_bytes=vmem_limit,
        ),
        cost_estimate=cost,
    )(x3, w2, b2)

    return out3.reshape(B, C, F, T)


def layer_norm_ref(x, w, b):
    # Pure-JAX reference matching the PyTorch forward exactly.
    mean = jnp.mean(x, axis=(1, 2), keepdims=True)
    n = x.shape[1] * x.shape[2]
    var = jnp.sum((x - mean) ** 2, axis=(1, 2), keepdims=True) / (n - 1)
    std = jnp.sqrt(var)
    return (x - mean) / (std + 1e-8) * w + b


if __name__ == "__main__":
    B, C, F, T = 2, 4, 16, 16

    key = jax.random.PRNGKey(0)
    kx, kb = jax.random.split(key)

    x = jax.random.normal(kx, (B, C, F, T), dtype=jnp.float32)

    # Deterministic parameter init mirroring the module's __init__:
    #   w = ones(1, c, f, 1);  b = rand(1, c, f, 1) * 1e-4
    w = jnp.ones((1, C, F, 1), dtype=jnp.float32)
    b = jax.random.uniform(kb, (1, C, F, 1), dtype=jnp.float32) * 1e-4

    out = jax.block_until_ready(layer_norm(x, w, b))

    ref = layer_norm_ref(x, w, b)
    assert out.shape == (B, C, F, T)
    assert jnp.allclose(out, ref, atol=1e-5, rtol=1e-5), "mismatch vs reference"

    print("KERNEL_OK")
</pallas_src>

<mosaic_0001>
module attributes {stable_mosaic.version = 11 : i64} {
  func.func @_layernorm_kernel(%arg0: i32, %arg1: i32, %arg2: memref<1x64x16xf32, #tpu.memory_space<vmem>>, %arg3: memref<64x1xf32, #tpu.memory_space<vmem>>, %arg4: memref<64x1xf32, #tpu.memory_space<vmem>>, %arg5: memref<1x64x16xf32, #tpu.memory_space<vmem>>) attributes {dimension_semantics = [#tpu.dimension_semantics<parallel>, #tpu.dimension_semantics<parallel>], iteration_bounds = array<i64: 2, 1>, scalar_prefetch = 0 : i64, scratch_operands = 0 : i64, tpu.core_type = #tpu.core_type<tc>, window_params = [{transform_indices = @transform_0, window_bounds = array<i64: 1, 64, 16>}, {pipeline_mode = #tpu.pipeline_mode<synchronous>, transform_indices = @transform_1, window_bounds = array<i64: 64, 1>}, {pipeline_mode = #tpu.pipeline_mode<synchronous>, transform_indices = @transform_2, window_bounds = array<i64: 64, 1>}, {transform_indices = @transform_3, window_bounds = array<i64: 1, 64, 16>}]} {
    %c0 = arith.constant 0 : index
    %c0_0 = arith.constant 0 : index
    %c0_1 = arith.constant 0 : index
    %0 = vector.load %arg2[%c0, %c0_0, %c0_1] : memref<1x64x16xf32, #tpu.memory_space<vmem>>, vector<1x64x16xf32>
    %1 = vector.shape_cast %0 : vector<1x64x16xf32> to vector<64x16xf32>
    %cst = arith.constant dense<0.000000e+00> : vector<16xf32>
    %2 = vector.multi_reduction <add>, %1, %cst [0] : vector<64x16xf32> to vector<16xf32>
    %3 = vector.shape_cast %2 : vector<16xf32> to vector<1x16xf32>
    %cst_2 = arith.constant 1.562500e-02 : f32
    %4 = vector.broadcast %cst_2 : f32 to vector<1x16xf32>
    %5 = arith.mulf %3, %4 : vector<1x16xf32>
    %6 = vector.broadcast %5 : vector<1x16xf32> to vector<64x16xf32>
    %7 = arith.subf %1, %6 : vector<64x16xf32>
    %8 = arith.mulf %7, %7 : vector<64x16xf32>
    %cst_3 = arith.constant dense<0.000000e+00> : vector<16xf32>
    %9 = vector.multi_reduction <add>, %8, %cst_3 [0] : vector<64x16xf32> to vector<16xf32>
    %10 = vector.shape_cast %9 : vector<16xf32> to vector<1x16xf32>
    %cst_4 = arith.constant 0.0158730168 : f32
    %11 = vector.broadcast %cst_4 : f32 to vector<1x16xf32>
    %12 = arith.mulf %10, %11 : vector<1x16xf32>
    %13 = math.sqrt %12 : vector<1x16xf32>
    %cst_5 = arith.constant 9.99999993E-9 : f32
    %14 = vector.broadcast %cst_5 : f32 to vector<1x16xf32>
    %15 = arith.addf %13, %14 : vector<1x16xf32>
    %16 = tpu.reciprocal %15 : vector<1x16xf32> -> vector<1x16xf32>
    %c0_6 = arith.constant 0 : index
    %c0_7 = arith.constant 0 : index
    %17 = vector.load %arg3[%c0_6, %c0_7] : memref<64x1xf32, #tpu.memory_space<vmem>>, vector<64x1xf32>
    %c0_8 = arith.constant 0 : index
    %c0_9 = arith.constant 0 : index
    %18 = vector.load %arg4[%c0_8, %c0_9] : memref<64x1xf32, #tpu.memory_space<vmem>>, vector<64x1xf32>
    %19 = vector.broadcast %16 : vector<1x16xf32> to vector<64x16xf32>
    %20 = arith.mulf %7, %19 : vector<64x16xf32>
    %21 = vector.broadcast %17 : vector<64x1xf32> to vector<64x16xf32>
    %22 = arith.mulf %20, %21 : vector<64x16xf32>
    %23 = vector.broadcast %18 : vector<64x1xf32> to vector<64x16xf32>
    %24 = arith.addf %22, %23 : vector<64x16xf32>
    %c0_10 = arith.constant 0 : index
    %c0_11 = arith.constant 0 : index
    %c0_12 = arith.constant 0 : index
    %25 = vector.load %arg5[%c0_10, %c0_11, %c0_12] : memref<1x64x16xf32, #tpu.memory_space<vmem>>, vector<1x64x16xf32>
    %26 = vector.shape_cast %25 : vector<1x64x16xf32> to vector<64x16xf32>
    %27 = vector.shape_cast %24 : vector<64x16xf32> to vector<1x64x16xf32>
    tpu.vector_store %arg5[%c0_10, %c0_11, %c0_12], %27 {strides = array<i32>} : memref<1x64x16xf32, #tpu.memory_space<vmem>>, vector<1x64x16xf32>,
    return
  }
  func.func @transform_0(%arg0: i32, %arg1: i32) -> (i32, i32, i32) {
    %c0_i32 = arith.constant 0 : i32
    %c0_i32_0 = arith.constant 0 : i32
    return %arg0, %c0_i32, %arg1 : i32, i32, i32
  }
  func.func @transform_1(%arg0: i32, %arg1: i32) -> (i32, i32) {
    %c0_i32 = arith.constant 0 : i32
    %c0_i32_0 = arith.constant 0 : i32
    %c0_i32_1 = arith.constant 0 : i32
    return %c0_i32, %c0_i32_0 : i32, i32
  }
  func.func @transform_2(%arg0: i32, %arg1: i32) -> (i32, i32) {
    %c0_i32 = arith.constant 0 : i32
    %c0_i32_0 = arith.constant 0 : i32
    %c0_i32_1 = arith.constant 0 : i32
    return %c0_i32, %c0_i32_0 : i32, i32
  }
  func.func @transform_3(%arg0: i32, %arg1: i32) -> (i32, i32, i32) {
    %c0_i32 = arith.constant 0 : i32
    %c0_i32_0 = arith.constant 0 : i32
    return %arg0, %c0_i32, %arg1 : i32, i32, i32
  }
}

</mosaic_0001>

<llo_original>
// kernel: layer_norm.1
$region0: #{layer_norm.1}
  #allocation0 [shape = 'u32[]', space=smem, size = 0x4, offset = 0x4, fixed_abs, tag = 'smem constant byte address 0x4 - core index']
  #allocation1 [shape = 'u32[144,128]{1,0:T(1,128)}', space=vmem, size = 0x12000, scoped, tag = 'internal scratch']
  %s0 = inlined_call_operand.vmem [shape: f32[2,64,16], index: 0, kind: input, shape index: {}]
  %s1 = inlined_call_operand.vmem [shape: f32[64,1], index: 1, kind: input, shape index: {}]
  %s2 = inlined_call_operand.vmem [shape: f32[64,1], index: 2, kind: input, shape index: {}]
  %s3 = inlined_call_operand.hbm [shape: f32[2,64,16], index: 3, kind: output, shape index: {}]
  %s4 = sld [smem:[#allocation0]]
  $region45: #{layer_norm.1} parent=0
    _
  %s6 = ssub.s32 1, %s4
  %s7 = scalar_select 0, %s6, %s4
  $region1: #{layer_norm.1} parent=0
    #allocation2 [shape = 'u8[65536]{0}', space=vmem, size = 0x10000, scoped, tag = 'output window, operand 0']
    #allocation3 [shape = 's32[2]{0}', space=sflag, size = 0x8, scoped, tag = 'scoped memory for layer_norm.1']
    %8 = vsyncpa [#allocation3], 0
    %s9 = scalar_lea.sflag [#allocation3], 1
    %10 = vsyncpa %s9, 0
    loop: start=0, step=1, limit=4
    $region2: #{layer_norm.1} parent=1 // loop_pre_header
      _
    $region3: #{layer_norm.1} parent=1 // loop_header
      %s12 = sphi 0, %s16
      %p13 = scmp.ge.s32.totalorder %s12, 4
      %s19 = sphi 0, %s31
      %s20 = sphi 0, %s27
      %s21 = sphi 0, %s19
      %s22 = sphi 0, %s20
      %s23 = sphi 0, %s21
      %s24 = sphi 0, %s22
      %s36 = sphi 0, %s38
      %s39 = sphi 0, %s36
      %s40 = sphi 0, %s39
      %s56 = sphi 0, %s40
      %s60 = sphi 0, %s60
      %s62 = sphi 0, %s60
      %s63 = sphi 0, %s62
      %s77 = sphi 0, %s63
      %s81 = sphi 0, %s81
      %s83 = sphi 0, %s81
      %s84 = sphi 0, %s83
      %s98 = sphi 0, %s84
      %s106 = sphi 0, %s108
      %s109 = sphi 0, %s106
      %s110 = sphi 0, %s109
      %s126 = sphi 0, %s110
    $region4: #{layer_norm.1} parent=1 // loop_header_branch
      %15 = sbr.rel (%p13) target = $region8
    $region5: #{layer_norm.1} parent=1 // loop_body
      %s17 = ssub.s32 %s12, 1
      %s18 = ssub.s32 %s12, 2
      %s25 = sadd.s32 1, %s20
      %p26 = scmp.ge.s32.totalorder %s25, 1
      %s27 = scalar_select %p26, 0, %s25
      %s28 = sadd.s32 1, %s19
      %s29 = scalar_select %p26, %s28, %s19
      %p30 = scmp.ge.s32.totalorder %s29, 2
      %s31 = scalar_select %p30, 0, %s29
      %s32 = ssub.s32 %s19, %s31
      %s33 = ssub.s32 %s20, %s27
      %s34 = sor.u32 %s32, %s33
      %p35 = scmp.eq.s32.totalorder %s34, 0
      %s37 = sadd.s32 %s36, 1
      %s38 = scalar_select %p35, %s36, %s37
      %p41 = pneg %p35
      %p42 = scmp.eq.s32.totalorder %s12, 1
      %p43 = por %p41, %p42
      %p44 = scmp.ne.s32.totalorder %s36, %s39
      %p45 = scmp.eq.s32.totalorder %s12, 0
      %p46 = por %p44, %p45
      %p47 = scmp.ne.s32.totalorder %s36, %s39
      %p48 = scmp.eq.s32.totalorder %s17, 1
      %p49 = por %p47, %p48
      %p50 = scmp.ne.s32.totalorder %s39, %s40
      %p51 = scmp.eq.s32.totalorder %s17, 0
      %p52 = por %p50, %p51
      %p53 = scmp.ne.s32.totalorder %s39, %s40
      %p54 = scmp.eq.s32.totalorder %s18, 1
      %p55 = por %p53, %p54
      %p57 = scmp.ne.s32.totalorder %s40, %s56
      %p58 = scmp.eq.s32.totalorder %s18, 0
      %p59 = por %p57, %p58
      %s61 = sadd.s32 %s60, 1
      %p64 = scmp.eq.s32.totalorder %s12, 1
      %p65 = scmp.ne.s32.totalorder %s60, %s62
      %p66 = scmp.eq.s32.totalorder %s12, 0
      %p67 = por %p65, %p66
      %p68 = scmp.ne.s32.totalorder %s60, %s62
      %p69 = scmp.eq.s32.totalorder %s17, 1
      %p70 = por %p68, %p69
      %p71 = scmp.ne.s32.totalorder %s62, %s63
      %p72 = scmp.eq.s32.totalorder %s17, 0
      %p73 = por %p71, %p72
      %p74 = scmp.ne.s32.totalorder %s62, %s63
      %p75 = scmp.eq.s32.totalorder %s18, 1
      %p76 = por %p74, %p75
      %p78 = scmp.ne.s32.totalorder %s63, %s77
      %p79 = scmp.eq.s32.totalorder %s18, 0
      %p80 = por %p78, %p79
      %s82 = sadd.s32 %s81, 1
      %p85 = scmp.eq.s32.totalorder %s12, 1
      %p86 = scmp.ne.s32.totalorder %s81, %s83
      %p87 = scmp.eq.s32.totalorder %s12, 0
      %p88 = por %p86, %p87
      %p89 = scmp.ne.s32.totalorder %s81, %s83
      %p90 = scmp.eq.s32.totalorder %s17, 1
      %p91 = por %p89, %p90
      %p92 = scmp.ne.s32.totalorder %s83, %s84
      %p93 = scmp.eq.s32.totalorder %s17, 0
      %p94 = por %p92, %p93
      %p95 = scmp.ne.s32.totalorder %s83, %s84
      %p96 = scmp.eq.s32.totalorder %s18, 1
      %p97 = por %p95, %p96
      %p99 = scmp.ne.s32.totalorder %s84, %s98
      %p100 = scmp.eq.s32.totalorder %s18, 0
      %p101 = por %p99, %p100
      %s102 = ssub.s32 %s19, %s31
      %s103 = ssub.s32 %s20, %s27
      %s104 = sor.u32 %s102, %s103
      %p105 = scmp.eq.s32.totalorder %s104, 0
      %s107 = sadd.s32 %s106, 1
      %s108 = scalar_select %p105, %s106, %s107
      %p111 = pneg %p105
      %p112 = scmp.eq.s32.totalorder %s12, 1
      %p113 = por %p111, %p112
      %p114 = scmp.ne.s32.totalorder %s106, %s109
      %p115 = scmp.eq.s32.totalorder %s12, 0
      %p116 = por %p114, %p115
      %p117 = scmp.ne.s32.totalorder %s106, %s109
      %p118 = scmp.eq.s32.totalorder %s17, 1
      %p119 = por %p117, %p118
      %p120 = scmp.ne.s32.totalorder %s109, %s110
      %p121 = scmp.eq.s32.totalorder %s17, 0
      %p122 = por %p120, %p121
      %p123 = scmp.ne.s32.totalorder %s109, %s110
      %p124 = scmp.eq.s32.totalorder %s18, 1
      %p125 = por %p123, %p124
      %p127 = scmp.ne.s32.totalorder %s110, %s126
      %p128 = scmp.eq.s32.totalorder %s18, 0
      %p129 = por %p127, %p128
      %p130 = scmp.le.s32.totalorder 1, %s12
      %p131 = scmp.lt.s32.totalorder %s12, 3
      %p132 = pnand %p130, %p131
      %p133 = pneg %p132
      // Predicated region
      $region9: #{layer_norm.1} parent=5 // pred_check
        _
      $region10: #{layer_norm.1} parent=5 // pred_check_branch
        %135 = sbr.rel (%p132) target = $region12
      $region11: #{layer_norm.1} parent=5 // pred_region
        %s136 = ssub.s32 %s12, 1
        // Predicated region
        $region13: #{layer_norm.1} parent=11 // pred_check
          %p137 = pneg %p73
        $region14: #{layer_norm.1} parent=11 // pred_check_branch
          %139 = sbr.rel (%p137) target = $region16
        $region15: #{layer_norm.1} parent=11 // pred_region
          _
        $region16: #{layer_norm.1} parent=11 // pred_fallthru
          _
        // Predicated region
        $region17: #{layer_norm.1} parent=11 // pred_check
          %p140 = pneg %p94
        $region18: #{layer_norm.1} parent=11 // pred_check_branch
          %142 = sbr.rel (%p140) target = $region20
        $region19: #{layer_norm.1} parent=11 // pred_region
          _
        $region20: #{layer_norm.1} parent=11 // pred_fallthru
          _
      $region12: #{layer_norm.1} parent=5 // pred_fallthru
        _
      %p143 = scmp.lt.s32.totalorder %s12, 2
      // Predicated region
      $region21: #{layer_norm.1} parent=5 // pred_check
        %p144 = pneg %p143
      $region22: #{layer_norm.1} parent=5 // pred_check_branch
        %146 = sbr.rel (%p144) target = $region24
      $region23: #{layer_norm.1} parent=5 // pred_region
        // Predicated region
        $region25: #{layer_norm.1} parent=23 // pred_check
          %p147 = pneg %p46
        $region26: #{layer_norm.1} parent=23 // pred_check_branch
          %149 = sbr.rel (%p147) target = $region28
        $region27: #{layer_norm.1} parent=23 // pred_region
          %p150 = scmp.lt.s32.totalorder %s19, 1
          %s151 = scalar_select %p150, %s19, 1
          %p152 = scmp.lt.s32.totalorder %s20, 0
          %s153 = scalar_select %p152, %s20, 0
          %s154 = smul.addr %s151, 8
          %s155 = sadd.s32 %s153, %s154
          %s156 = smul.addr %s155, 8
          %s157 = scalar_lea.vmem %s0, %s156
        $region28: #{layer_norm.1} parent=23 // pred_fallthru
          _
      $region24: #{layer_norm.1} parent=5 // pred_fallthru
        _
      %p158 = scmp.le.s32.totalorder 1, %s12
      %p159 = scmp.lt.s32.totalorder %s12, 3
      %p160 = pnand %p158, %p159
      %p161 = pneg %p160
      // Predicated region
      $region29: #{layer_norm.1} parent=5 // pred_check
        _
      $region30: #{layer_norm.1} parent=5 // pred_check_branch
        %163 = sbr.rel (%p160) target = $region32
      $region31: #{layer_norm.1} parent=5 // pred_region
        %s164 = ssub.s32 %s12, 1
        %p165 = scmp.lt.s32.totalorder %s21, 1
        %s166 = scalar_select %p165, %s21, 1
        %p167 = scmp.lt.s32.totalorder %s22, 0
        %s168 = scalar_select %p167, %s22, 0
        %s169 = smul.addr %s166, 8
        %s170 = sadd.s32 %s168, %s169
        %s171 = smul.addr %s170, 8
        %s172 = scalar_lea.vmem %s0, %s171
        %p173 = pneg %p52
        %p174 = pneg %p49
        %p175 = pneg %p73
        %p176 = pneg %p70
        %p177 = pneg %p94
        %p178 = pneg %p91
        %p179 = pneg %p122
        %p180 = pneg %p119
        %s181 = sand.u32 %s109, 1
        %s182 = scalar_lea.sflag [#allocation3], %s181
        %s183 = sand.u32 %s109, 1
        %s184 = smul.addr %s183, 64
        %s185 = scalar_lea.vmem [#allocation2], %s184
        %p186 = scmp.lt.s32.totalorder %s21, 1
        %s187 = scalar_select %p186, %s21, 1
        %p188 = scmp.lt.s32.totalorder %s22, 0
        %s189 = scalar_select %p188, %s22, 0
        %s190 = smul.addr %s187, 8
        %s191 = sadd.s32 %s189, %s190
        %s192 = smul.addr %s191, 8
        %s193 = scalar_lea.vmem %s0, %s192
        %v194 = vld [vmem:[%s193] sm:$0xff]
        %v195 = vld [vmem:[%s193 + $0x8] sm:$0xff]
        %v196 = vld [vmem:[%s193 + $0x10] sm:$0xff]
        %v197 = vld [vmem:[%s193 + $0x18] sm:$0xff]
        %v198 = vld [vmem:[%s193 + $0x20] sm:$0xff]
        %v199 = vld [vmem:[%s193 + $0x28] sm:$0xff]
        %v200 = vld [vmem:[%s193 + $0x30] sm:$0xff]
        %v201 = vld [vmem:[%s193 + $0x38] sm:$0xff]
        %vm202 = vcmask 130048
        %v203 = vsel %vm202, %v194, 0.0
        %v204 = vsel %vm202, %v195, 0.0
        %v205 = vadd.f32 %v203, %v204
        %v206 = vsel %vm202, %v196, 0.0
        %v207 = vadd.f32 %v205, %v206
        %v208 = vsel %vm202, %v197, 0.0
        %v209 = vadd.f32 %v207, %v208
        %v210 = vsel %vm202, %v198, 0.0
        %v211 = vadd.f32 %v209, %v210
        %v212 = vsel %vm202, %v199, 0.0
        %v213 = vadd.f32 %v211, %v212
        %v214 = vsel %vm202, %v200, 0.0
        %v215 = vadd.f32 %v213, %v214
        %v216 = vsel %vm202, %v201, 0.0
        %v217 = vadd.f32 %v215, %v216
        %v218 = vrot.slane %v217, 4
        %v219 = vadd.f32 %v217, %v218
        %v220 = vrot.slane %v219, 2
        %v221 = vadd.f32 %v219, %v220
        %v222 = vrot.slane %v221, 1
        %v223 = vadd.f32 %v221, %v222
        %v224 = vmul.f32 %v223, 0.015625
        %v225 = vsub.f32 %v194, %v224
        %v226 = vsub.f32 %v195, %v224
        %v227 = vsub.f32 %v196, %v224
        %v228 = vsub.f32 %v197, %v224
        %v229 = vsub.f32 %v198, %v224
        %v230 = vsub.f32 %v199, %v224
        %v231 = vsub.f32 %v200, %v224
        %v232 = vsub.f32 %v201, %v224
        %v233 = vmul.f32 %v225, %v225
        %v234 = vmul.f32 %v226, %v226
        %v235 = vmul.f32 %v227, %v227
        %v236 = vmul.f32 %v228, %v228
        %v237 = vmul.f32 %v229, %v229
        %v238 = vmul.f32 %v230, %v230
        %v239 = vmul.f32 %v231, %v231
        %v240 = vmul.f32 %v232, %v232
        %v241 = vsel %vm202, %v233, 0.0
        %v242 = vsel %vm202, %v234, 0.0
        %v243 = vadd.f32 %v241, %v242
        %v244 = vsel %vm202, %v235, 0.0
        %v245 = vadd.f32 %v243, %v244
        %v246 = vsel %vm202, %v236, 0.0
        %v247 = vadd.f32 %v245, %v246
        %v248 = vsel %vm202, %v237, 0.0
        %v249 = vadd.f32 %v247, %v248
        %v250 = vsel %vm202, %v238, 0.0
        %v251 = vadd.f32 %v249, %v250
        %v252 = vsel %vm202, %v239, 0.0
        %v253 = vadd.f32 %v251, %v252
        %v254 = vsel %vm202, %v240, 0.0
        %v255 = vadd.f32 %v253, %v254
        %v256 = vrot.slane %v255, 4
        %v257 = vadd.f32 %v255, %v256
        %v258 = vrot.slane %v257, 2
        %v259 = vadd.f32 %v257, %v258
        %v260 = vrot.slane %v259, 1
        %v261 = vadd.f32 %v259, %v260
        %v262 = vmul.f32 %v261, 0.015873017
        %v263 = vrsqrt.pop %v262
        %v264 = vmul.f32 %v262, %v263
        %vm265 = vcmp.eq.f32.partialorder %v262, inf
        %v266 = vsel %vm265, %v262, %v264
        %vm267 = vcmp.eq.f32.partialorder %v262, 0.0
        %v268 = vand.u32 %v262, 2147483648
        %v269 = vsel %vm267, %v268, %v266
        %v270 = vadd.f32 %v269, 1e-08
        %v271 = vrcp.pop %v270
        %v272 = vld [vmem:[%s1] sm:$0xff]
        %v273 = vld [vmem:[%s1 + $0x8] sm:$0xff]
        %v274 = vld [vmem:[%s1 + $0x10] sm:$0xff]
        %v275 = vld [vmem:[%s1 + $0x18] sm:$0xff]
        %v276 = vld [vmem:[%s1 + $0x20] sm:$0xff]
        %v277 = vld [vmem:[%s1 + $0x28] sm:$0xff]
        %v278 = vld [vmem:[%s1 + $0x30] sm:$0xff]
        %v279 = vld [vmem:[%s1 + $0x38] sm:$0xff]
        %v280 = vld [vmem:[%s2] sm:$0xff]
        %v281 = vld [vmem:[%s2 + $0x8] sm:$0xff]
        %v282 = vld [vmem:[%s2 + $0x10] sm:$0xff]
        %v283 = vld [vmem:[%s2 + $0x18] sm:$0xff]
        %v284 = vld [vmem:[%s2 + $0x20] sm:$0xff]
        %v285 = vld [vmem:[%s2 + $0x28] sm:$0xff]
        %v286 = vld [vmem:[%s2 + $0x30] sm:$0xff]
        %v287 = vld [vmem:[%s2 + $0x38] sm:$0xff]
        %v288 = vmul.f32 %v225, %v271
        %v289 = vmul.f32 %v226, %v271
        %v290 = vmul.f32 %v227, %v271
        %v291 = vmul.f32 %v228, %v271
        %v292 = vmul.f32 %v229, %v271
        %v293 = vmul.f32 %v230, %v271
        %v294 = vmul.f32 %v231, %v271
        %v295 = vmul.f32 %v232, %v271
        %297 = vset.pattern.permute.xlu0 0
        %298 = vperm.xlu0 %297, %v272
        %v299 = vpop.permute.xlu0 %298
        %302 = vset.pattern.permute.xlu0 0
        %303 = vperm.xlu0 %302, %v273
        %v304 = vpop.permute.xlu0 %303
        %307 = vset.pattern.permute.xlu0 0
        %308 = vperm.xlu0 %307, %v274
        %v309 = vpop.permute.xlu0 %308
        %312 = vset.pattern.permute.xlu0 0
        %313 = vperm.xlu0 %312, %v275
        %v314 = vpop.permute.xlu0 %313
        %317 = vset.pattern.permute.xlu0 0
        %318 = vperm.xlu0 %317, %v276
        %v319 = vpop.permute.xlu0 %318
        %322 = vset.pattern.permute.xlu0 0
        %323 = vperm.xlu0 %322, %v277
        %v324 = vpop.permute.xlu0 %323
        %327 = vset.pattern.permute.xlu0 0
        %328 = vperm.xlu0 %327, %v278
        %v329 = vpop.permute.xlu0 %328
        %332 = vset.pattern.permute.xlu0 0
        %333 = vperm.xlu0 %332, %v279
        %v334 = vpop.permute.xlu0 %333
        %v336 = vmul.f32 %v288, %v299
        %v337 = vmul.f32 %v289, %v304
        %v338 = vmul.f32 %v290, %v309
        %v339 = vmul.f32 %v291, %v314
        %v340 = vmul.f32 %v292, %v319
        %v341 = vmul.f32 %v293, %v324
        %v342 = vmul.f32 %v294, %v329
        %v343 = vmul.f32 %v295, %v334
        %345 = vset.pattern.permute.xlu0 0
        %346 = vperm.xlu0 %345, %v280
        %v347 = vpop.permute.xlu0 %346
        %350 = vset.pattern.permute.xlu0 0
        %351 = vperm.xlu0 %350, %v281
        %v352 = vpop.permute.xlu0 %351
        %355 = vset.pattern.permute.xlu0 0
        %356 = vperm.xlu0 %355, %v282
        %v357 = vpop.permute.xlu0 %356
        %360 = vset.pattern.permute.xlu0 0
        %361 = vperm.xlu0 %360, %v283
        %v362 = vpop.permute.xlu0 %361
        %365 = vset.pattern.permute.xlu0 0
        %366 = vperm.xlu0 %365, %v284
        %v367 = vpop.permute.xlu0 %366
        %370 = vset.pattern.permute.xlu0 0
        %371 = vperm.xlu0 %370, %v285
        %v372 = vpop.permute.xlu0 %371
        %375 = vset.pattern.permute.xlu0 0
        %376 = vperm.xlu0 %375, %v286
        %v377 = vpop.permute.xlu0 %376
        %380 = vset.pattern.permute.xlu0 0
        %381 = vperm.xlu0 %380, %v287
        %v382 = vpop.permute.xlu0 %381
        %v384 = vadd.f32 %v336, %v347
        %v385 = vadd.f32 %v337, %v352
        %v386 = vadd.f32 %v338, %v357
        %v387 = vadd.f32 %v339, %v362
        %v388 = vadd.f32 %v340, %v367
        %v389 = vadd.f32 %v341, %v372
        %v390 = vadd.f32 %v342, %v377
        %v391 = vadd.f32 %v343, %v382
        %392 = vst.msk [vmem:[%s185] sm:$0xff] %vm202, %v384
        %393 = vst.msk [vmem:[%s185 + $0x8] sm:$0xff] %vm202, %v385
        %394 = vst.msk [vmem:[%s185 + $0x10] sm:$0xff] %vm202, %v386
        %395 = vst.msk [vmem:[%s185 + $0x18] sm:$0xff] %vm202, %v387
        %396 = vst.msk [vmem:[%s185 + $0x20] sm:$0xff] %vm202, %v388
        %397 = vst.msk [vmem:[%s185 + $0x28] sm:$0xff] %vm202, %v389
        %398 = vst.msk [vmem:[%s185 + $0x30] sm:$0xff] %vm202, %v390
        %399 = vst.msk [vmem:[%s185 + $0x38] sm:$0xff] %vm202, %v391
        %s400 = sand.u32 %s109, 1
        %s401 = scalar_lea.sflag [#allocation3], %s400
        %s402 = sand.u32 %s109, 1
        %s403 = smul.addr %s402, 64
        %s404 = scalar_lea.vmem [#allocation2], %s403
        // Predicated region
        $region33: #{layer_norm.1} parent=31 // pred_check
          %p405 = pneg %p119
        $region34: #{layer_norm.1} parent=31 // pred_check_branch
          %407 = sbr.rel (%p405) target = $region36
        $region35: #{layer_norm.1} parent=31 // pred_region
          %s409 = ssub.s32 1024, 1024
          %410 = vsyncadd %s401, %s409
          %s411 = smul.addr %s21, 8
          %s412 = sadd.s32 %s22, %s411
          %s413 = smul.addr %s412, 128
          %s414 = scalar_lea.hbm %s3, %s413
          %s415 = sshll.u32 %s404, 4
          %s416 = int_to_ptr.vmem [resolvable:$true] %s415
          %421 = dma.vmem_to_hbm [thread:$0]  %s416, 1024, %s414, %s401, 128, 128, 8
        $region36: #{layer_norm.1} parent=31 // pred_fallthru
          _
      $region32: #{layer_norm.1} parent=5 // pred_fallthru
        _
      %p422 = scmp.le.s32.totalorder 2, %s12
      // Predicated region
      $region37: #{layer_norm.1} parent=5 // pred_check
        %p423 = pneg %p422
      $region38: #{layer_norm.1} parent=5 // pred_check_branch
        %425 = sbr.rel (%p423) target = $region40
      $region39: #{layer_norm.1} parent=5 // pred_region
        %s426 = ssub.s32 %s12, 2
        // Predicated region
        $region41: #{layer_norm.1} parent=39 // pred_check
          %p427 = pneg %p125
        $region42: #{layer_norm.1} parent=39 // pred_check_branch
          %429 = sbr.rel (%p427) target = $region44
        $region43: #{layer_norm.1} parent=39 // pred_region
          %s430 = sand.u32 %s110, 1
          %s431 = scalar_lea.sflag [#allocation3], %s430
          %s432 = sand.u32 %s110, 1
          %s433 = smul.addr %s432, 64
          %s434 = scalar_lea.vmem [#allocation2], %s433
          %435 = dma.done %s431, 1024
        $region44: #{layer_norm.1} parent=39 // pred_fallthru
          _
      $region40: #{layer_norm.1} parent=5 // pred_fallthru
        _
    $region6: #{layer_norm.1} parent=1 // loop_footer
      %s16 = sadd.s32 1, %s12
    $region7: #{layer_norm.1} parent=1 // loop_footer_branch
      %11 = sbr.rel target = $region3
    $region8: #{layer_norm.1} parent=1 // loop_exit
      _
    %436 = vsyncpa [#allocation3], 1
    %s437 = scalar_lea.sflag [#allocation3], 1
    %438 = vsyncpa %s437, 1

</llo_original>
